<compile_context>
chip_gen: v7x
topology: tpu7x:2x2x1
jax: 0.10.0
libtpu: 0.0.40
codegen_flags: <defaults>
</compile_context>

<pallas_src>
import functools
import math

import jax
import jax.numpy as jnp
from jax.experimental import pallas as pl
from jax.experimental.pallas import tpu as pltpu


_DEFAULT_VMEM_BUDGET = 28 * 1024 * 1024   # double-buffered tile footprint cap
_VMEM_LIMIT_BYTES = 48 * 1024 * 1024      # ≤ v7x physical (64 MiB), > v5e default


def _round_up(x, m):
    return ((x + m - 1) // m) * m


def _cdiv(a, b):
    return (a + b - 1) // b


def _select_tiles(M, N, K, in_itemsize, out_itemsize, budget):
    """Pick (tm, tn, tk, full_k) under a VMEM byte budget."""
    tm = M if M <= 256 else 256
    tn = N if N <= 512 else 512
    sub = 16 if in_itemsize == 2 else 8   # bf16 packs 16 rows per sublane group

    # v7x has 2 TensorCores per chip: make sure at least one "parallel" grid
    # axis has >= 2 blocks when the problem is big enough to split.
    if _cdiv(M, tm) == 1 and _cdiv(N, tn) == 1:
        if N >= 256:
            tn = _round_up(_cdiv(N, 2), 128)
        elif M >= 2 * sub:
            tm = _round_up(_cdiv(M, 2), sub)

    def fits(tk, full_k):
        vmem = 2 * (tm + tn) * tk * in_itemsize + 2 * tm * tn * out_itemsize
        if not full_k:
            vmem += tm * tn * 4           # f32 accumulator scratch
        return vmem <= budget

    # Prefer a single K block (no accumulator / K grid axis) when it fits.
    if fits(K, True):
        return tm, tn, K, True
    tk = 2048
    while tk > 128 and not fits(tk, False):
        tk //= 2
    return tm, tn, tk, False


def _make_kernel(lr_mul, has_bias, multi_k, compute_dtype):
    lr_mul = float(lr_mul)

    def _matmul(x, w):
        if compute_dtype is not None:
            x = x.astype(compute_dtype)
            w = w.astype(compute_dtype)
        # out[m, n] = sum_k x[m, k] * w[n, k]  — weight kept as (out, in), so
        # no host-side transpose; the MXU consumes the transposed RHS tile.
        return jax.lax.dot_general(
            x, w,
            dimension_numbers=(((1,), (1,)), ((), ())),
            preferred_element_type=jnp.float32,
        )

    if not multi_k:
        # Fast path: the whole reduction fits in one K block.
        def kernel(*refs):
            if has_bias:
                x_ref, w_ref, b_ref, o_ref = refs
            else:
                x_ref, w_ref, o_ref = refs
                b_ref = None
            acc = _matmul(x_ref[...], w_ref[...])
            if b_ref is not None:
                acc = acc + b_ref[...].astype(jnp.float32)
            o_ref[...] = (acc * lr_mul).astype(o_ref.dtype)

        return kernel

    # Multi-K fallback: f32 accumulator in VMEM scratch (P1 + P3).
    def kernel(*refs):
        if has_bias:
            x_ref, w_ref, b_ref, o_ref, acc_ref = refs
        else:
            x_ref, w_ref, o_ref, acc_ref = refs
            b_ref = None
        k = pl.program_id(2)

        @pl.when(k == 0)
        def _():
            acc_ref[...] = jnp.zeros_like(acc_ref)

        acc_ref[...] += _matmul(x_ref[...], w_ref[...])

        @pl.when(k == pl.num_programs(2) - 1)
        def _():
            acc = acc_ref[...]
            if b_ref is not None:
                acc = acc + b_ref[...].astype(jnp.float32)
            o_ref[...] = (acc * lr_mul).astype(o_ref.dtype)

    return kernel


def equal_linear(x, weight, bias=None, lr_mul=1.0, *, compute_dtype=None,
                 vmem_budget_bytes=_DEFAULT_VMEM_BUDGET):
    """Pallas TPU forward for EqualLinear.

    x:      (..., in_dim)
    weight: (out_dim, in_dim)   (native PyTorch layout; never transposed on host)
    bias:   (out_dim,) or None
    compute_dtype: optional MXU operand dtype (e.g. jnp.bfloat16); accumulation
                   stays f32. Default None keeps the input dtype (f32-exact).
    returns (..., out_dim) with the same dtype as x.
    """
    orig_dtype = x.dtype
    *batch_shape, in_dim = x.shape
    out_dim, w_in_dim = weight.shape
    assert w_in_dim == in_dim, "weight in_dim mismatch"

    M = math.prod(batch_shape) if batch_shape else 1
    K, N = in_dim, out_dim
    has_bias = bias is not None

    # Degenerate sizes: no kernel launch.
    if M == 0 or N == 0:
        return jnp.zeros((*batch_shape, out_dim), dtype=orig_dtype)
    if K == 0:
        out = jnp.zeros((*batch_shape, out_dim), dtype=jnp.float32)
        if has_bias:
            out = out + bias.astype(jnp.float32) * lr_mul
        return out.astype(orig_dtype)

    x2 = x.reshape(M, K)

    in_itemsize = jnp.dtype(compute_dtype).itemsize if compute_dtype is not None \
        else jnp.dtype(x.dtype).itemsize
    out_itemsize = jnp.dtype(orig_dtype).itemsize

    tm, tn, tk, full_k = _select_tiles(M, N, K, in_itemsize, out_itemsize,
                                       vmem_budget_bytes)

    # Pad ONLY along K, and only in the multi-K fallback when tk doesn't divide K
    # (zeros along the reduction axis don't change the matmul). M/N ragged blocks
    # are handled by Pallas masked stores — no output slicing afterwards.
    x_arg, w_arg, Kp = x2, weight, K
    if not full_k and K % tk != 0:
        Kp = _round_up(K, tk)
        x_arg = jnp.pad(x2, ((0, 0), (0, Kp - K)))
        w_arg = jnp.pad(weight, ((0, 0), (0, Kp - K)))

    if full_k:
        grid = (_cdiv(M, tm), _cdiv(N, tn))
        in_specs = [
            pl.BlockSpec((tm, K), lambda i, j: (i, 0)),    # x tile
            pl.BlockSpec((tn, K), lambda i, j: (j, 0)),    # W tile (out, in)
        ]
        if has_bias:
            in_specs.append(pl.BlockSpec((1, tn), lambda i, j: (0, j)))
        out_specs = pl.BlockSpec((tm, tn), lambda i, j: (i, j))
        scratch_shapes = []
        dim_semantics = ("parallel", "parallel")
    else:
        grid = (_cdiv(M, tm), _cdiv(N, tn), Kp // tk)
        in_specs = [
            pl.BlockSpec((tm, tk), lambda i, j, k: (i, k)),
            pl.BlockSpec((tn, tk), lambda i, j, k: (j, k)),
        ]
        if has_bias:
            in_specs.append(pl.BlockSpec((1, tn), lambda i, j, k: (0, j)))
        out_specs = pl.BlockSpec((tm, tn), lambda i, j, k: (i, j))
        scratch_shapes = [pltpu.VMEM((tm, tn), jnp.float32)]
        dim_semantics = ("parallel", "parallel", "arbitrary")

    operands = [x_arg, w_arg]
    if has_bias:
        operands.append(bias.reshape(1, N))

    kernel = _make_kernel(lr_mul, has_bias, not full_k, compute_dtype)

    cost = pl.CostEstimate(
        flops=2 * M * N * K,
        transcendentals=0,
        bytes_accessed=(M * K) * jnp.dtype(x.dtype).itemsize
                       + (N * K) * jnp.dtype(weight.dtype).itemsize
                       + M * N * out_itemsize
                       + (N * jnp.dtype(bias.dtype).itemsize if has_bias else 0),
    )

    out = pl.pallas_call(
        kernel,
        out_shape=jax.ShapeDtypeStruct((M, N), orig_dtype),
        grid_spec=pltpu.PrefetchScalarGridSpec(
            num_scalar_prefetch=0,
            grid=grid,
            in_specs=in_specs,
            out_specs=out_specs,
            scratch_shapes=scratch_shapes,
        ),
        compiler_params=pltpu.CompilerParams(
            dimension_semantics=dim_semantics,
            vmem_limit_bytes=_VMEM_LIMIT_BYTES,
        ),
        cost_estimate=cost,
    )(*operands)

    return out.reshape(*batch_shape, out_dim)


def _equal_linear_reference(x, weight, bias, lr_mul):
    # Pure-JAX reference with the exact PyTorch semantics.
    w = weight * lr_mul
    out = jnp.einsum("...k,nk->...n", x, w)
    if bias is not None:
        out = out + bias * lr_mul
    return out


if __name__ == "__main__":
    key = jax.random.PRNGKey(0)
    k1, k2, k3, k4, k5 = jax.random.split(key, 5)

    # Case 1: small shapes with bias (single-K fast path).
    batch, seq, in_dim, out_dim = 2, 8, 32, 64
    lr_mul = 0.5
    x = jax.random.normal(k1, (batch, seq, in_dim), dtype=jnp.float32)
    weight = jax.random.normal(k2, (out_dim, in_dim), dtype=jnp.float32)
    bias = jax.random.normal(k3, (out_dim,), dtype=jnp.float32)

    y = jax.block_until_ready(equal_linear(x, weight, bias, lr_mul=lr_mul))
    y_ref = _equal_linear_reference(x, weight, bias, lr_mul)
    assert y.shape == (batch, seq, out_dim) and y.dtype == x.dtype
    assert jnp.allclose(y, y_ref, atol=1e-4, rtol=1e-4)

    # Case 2: non-128-aligned dims, no bias (ragged blocks / masked stores).
    x2 = jax.random.normal(k4, (3, 5, 100), dtype=jnp.float32)
    w2 = jax.random.normal(k5, (200, 100), dtype=jnp.float32)
    y2 = jax.block_until_ready(equal_linear(x2, w2, None, lr_mul=2.0))
    y2_ref = _equal_linear_reference(x2, w2, None, 2.0)
    assert y2.shape == (3, 5, 200) and y2.dtype == x2.dtype
    assert jnp.allclose(y2, y2_ref, atol=1e-3, rtol=1e-4)

    # Case 3: force the multi-K accumulator path via an artificially tiny
    # VMEM budget (exercises the K-grid / pl.when init-finalize code path).
    x3 = jax.random.normal(k1, (16, 256), dtype=jnp.float32)
    w3 = jax.random.normal(k2, (64, 256), dtype=jnp.float32)
    b3 = jax.random.normal(k3, (64,), dtype=jnp.float32)
    y3 = jax.block_until_ready(
        equal_linear(x3, w3, b3, lr_mul=0.25, vmem_budget_bytes=64 * 1024))
    y3_ref = _equal_linear_reference(x3, w3, b3, 0.25)
    assert y3.shape == (16, 64) and jnp.allclose(y3, y3_ref, atol=1e-3, rtol=1e-4)

    print("KERNEL_OK")
</pallas_src>

<mosaic_0001>
module attributes {stable_mosaic.version = 11 : i64} {
  func.func @kernel(%arg0: i32, %arg1: i32, %arg2: memref<8x32xf32, #tpu.memory_space<vmem>>, %arg3: memref<64x32xf32, #tpu.memory_space<vmem>>, %arg4: memref<1x64xf32, #tpu.memory_space<vmem>>, %arg5: memref<8x64xf32, #tpu.memory_space<vmem>>) attributes {dimension_semantics = [#tpu.dimension_semantics<parallel>, #tpu.dimension_semantics<parallel>], iteration_bounds = array<i64: 2, 1>, scalar_prefetch = 0 : i64, scratch_operands = 0 : i64, tpu.core_type = #tpu.core_type<tc>, window_params = [{transform_indices = @transform_0, window_bounds = array<i64: 8, 32>}, {transform_indices = @transform_1, window_bounds = array<i64: 64, 32>}, {transform_indices = @transform_2, window_bounds = array<i64: 1, 64>}, {transform_indices = @transform_3, window_bounds = array<i64: 8, 64>}]} {
    %c0 = arith.constant 0 : index
    %c0_0 = arith.constant 0 : index
    %0 = vector.load %arg2[%c0, %c0_0] : memref<8x32xf32, #tpu.memory_space<vmem>>, vector<8x32xf32>
    %c0_1 = arith.constant 0 : index
    %c0_2 = arith.constant 0 : index
    %1 = vector.load %arg3[%c0_1, %c0_2] : memref<64x32xf32, #tpu.memory_space<vmem>>, vector<64x32xf32>
    %cst = arith.constant dense<0.000000e+00> : vector<8x64xf32>
    %2 = tpu.matmul %0, %1, %cst {dimension_numbers = #tpu.dot_dimension_numbers<[1], [1], [0], [0], [0, 0, 1, 0], [], []>} : vector<8x32xf32>, vector<64x32xf32>, vector<8x64xf32> -> vector<8x64xf32>
    %c0_3 = arith.constant 0 : index
    %c0_4 = arith.constant 0 : index
    %3 = vector.load %arg4[%c0_3, %c0_4] : memref<1x64xf32, #tpu.memory_space<vmem>>, vector<1x64xf32>
    %4 = vector.broadcast %3 : vector<1x64xf32> to vector<8x64xf32>
    %5 = arith.addf %2, %4 : vector<8x64xf32>
    %cst_5 = arith.constant 5.000000e-01 : f32
    %6 = vector.broadcast %cst_5 : f32 to vector<8x64xf32>
    %7 = arith.mulf %5, %6 : vector<8x64xf32>
    %c0_6 = arith.constant 0 : index
    %c0_7 = arith.constant 0 : index
    %8 = vector.load %arg5[%c0_6, %c0_7] : memref<8x64xf32, #tpu.memory_space<vmem>>, vector<8x64xf32>
    tpu.vector_store %arg5[%c0_6, %c0_7], %7 {strides = array<i32>} : memref<8x64xf32, #tpu.memory_space<vmem>>, vector<8x64xf32>,
    return
  }
  func.func @transform_0(%arg0: i32, %arg1: i32) -> (i32, i32) {
    %c0_i32 = arith.constant 0 : i32
    %c0_i32_0 = arith.constant 0 : i32
    return %arg0, %c0_i32 : i32, i32
  }
  func.func @transform_1(%arg0: i32, %arg1: i32) -> (i32, i32) {
    %c0_i32 = arith.constant 0 : i32
    %c0_i32_0 = arith.constant 0 : i32
    return %arg1, %c0_i32 : i32, i32
  }
  func.func @transform_2(%arg0: i32, %arg1: i32) -> (i32, i32) {
    %c0_i32 = arith.constant 0 : i32
    %c0_i32_0 = arith.constant 0 : i32
    return %c0_i32, %arg1 : i32, i32
  }
  func.func @transform_3(%arg0: i32, %arg1: i32) -> (i32, i32) {
    %c0_i32 = arith.constant 0 : i32
    return %arg0, %arg1 : i32, i32
  }
}

</mosaic_0001>

<llo_original>
// kernel: tpu_custom_call.1
$region0: #{tpu_custom_call.1}
  #allocation0 [shape = 'u32[]', space=smem, size = 0x4, offset = 0x4, fixed_abs, tag = 'smem constant byte address 0x4 - core index']
  #allocation1 [shape = 'u32[144,128]{1,0:T(1,128)}', space=vmem, size = 0x12000, scoped, tag = 'internal scratch']
  %s0 = inlined_call_operand.vmem [shape: f32[16,32], index: 0, kind: input, shape index: {}]
  %s1 = inlined_call_operand.vmem [shape: f32[64,32], index: 1, kind: input, shape index: {}]
  %s2 = inlined_call_operand.vmem [shape: f32[1,64], index: 2, kind: input, shape index: {}]
  %s3 = inlined_call_operand.hbm [shape: f32[16,64], index: 3, kind: output, shape index: {}]
  %s4 = sld [smem:[#allocation0]]
  $region45: #{tpu_custom_call.1} parent=0
    _
  %s6 = ssub.s32 1, %s4
  %s7 = scalar_select 0, %s6, %s4
  $region1: #{tpu_custom_call.1} parent=0
    #allocation2 [shape = 'u8[8192]{0}', space=vmem, size = 0x2000, scoped, tag = 'output window, operand 0']
    #allocation3 [shape = 's32[2]{0}', space=sflag, size = 0x8, scoped, tag = 'scoped memory for tpu_custom_call.1']
    %8 = vsyncpa [#allocation3], 0
    %s9 = scalar_lea.sflag [#allocation3], 1
    %10 = vsyncpa %s9, 0
    loop: start=0, step=1, limit=4
    $region2: #{tpu_custom_call.1} parent=1 // loop_pre_header
      _
    $region3: #{tpu_custom_call.1} parent=1 // loop_header
      %s12 = sphi 0, %s16
      %p13 = scmp.ge.s32.totalorder %s12, 4
      %s19 = sphi 0, %s31
      %s20 = sphi 0, %s27
      %s21 = sphi 0, %s19
      %s22 = sphi 0, %s20
      %s23 = sphi 0, %s21
      %s24 = sphi 0, %s22
      %s34 = sphi 0, %s36
      %s37 = sphi 0, %s34
      %s38 = sphi 0, %s37
      %s54 = sphi 0, %s38
      %s60 = sphi 0, %s62
      %s63 = sphi 0, %s60
      %s64 = sphi 0, %s63
      %s80 = sphi 0, %s64
      %s86 = sphi 0, %s88
      %s89 = sphi 0, %s86
      %s90 = sphi 0, %s89
      %s106 = sphi 0, %s90
      %s114 = sphi 0, %s116
      %s117 = sphi 0, %s114
      %s118 = sphi 0, %s117
      %s134 = sphi 0, %s118
    $region4: #{tpu_custom_call.1} parent=1 // loop_header_branch
      %15 = sbr.rel (%p13) target = $region8
    $region5: #{tpu_custom_call.1} parent=1 // loop_body
      %s17 = ssub.s32 %s12, 1
      %s18 = ssub.s32 %s12, 2
      %s25 = sadd.s32 1, %s20
      %p26 = scmp.ge.s32.totalorder %s25, 1
      %s27 = scalar_select %p26, 0, %s25
      %s28 = sadd.s32 1, %s19
      %s29 = scalar_select %p26, %s28, %s19
      %p30 = scmp.ge.s32.totalorder %s29, 2
      %s31 = scalar_select %p30, 0, %s29
      %s32 = ssub.s32 %s19, %s31
      %p33 = scmp.eq.s32.totalorder %s32, 0
      %s35 = sadd.s32 %s34, 1
      %s36 = scalar_select %p33, %s34, %s35
      %p39 = pneg %p33
      %p40 = scmp.eq.s32.totalorder %s12, 1
      %p41 = por %p39, %p40
      %p42 = scmp.ne.s32.totalorder %s34, %s37
      %p43 = scmp.eq.s32.totalorder %s12, 0
      %p44 = por %p42, %p43
      %p45 = scmp.ne.s32.totalorder %s34, %s37
      %p46 = scmp.eq.s32.totalorder %s17, 1
      %p47 = por %p45, %p46
      %p48 = scmp.ne.s32.totalorder %s37, %s38
      %p49 = scmp.eq.s32.totalorder %s17, 0
      %p50 = por %p48, %p49
      %p51 = scmp.ne.s32.totalorder %s37, %s38
      %p52 = scmp.eq.s32.totalorder %s18, 1
      %p53 = por %p51, %p52
      %p55 = scmp.ne.s32.totalorder %s38, %s54
      %p56 = scmp.eq.s32.totalorder %s18, 0
      %p57 = por %p55, %p56
      %s58 = ssub.s32 %s20, %s27
      %p59 = scmp.eq.s32.totalorder %s58, 0
      %s61 = sadd.s32 %s60, 1
      %s62 = scalar_select %p59, %s60, %s61
      %p65 = pneg %p59
      %p66 = scmp.eq.s32.totalorder %s12, 1
      %p67 = por %p65, %p66
      %p68 = scmp.ne.s32.totalorder %s60, %s63
      %p69 = scmp.eq.s32.totalorder %s12, 0
      %p70 = por %p68, %p69
      %p71 = scmp.ne.s32.totalorder %s60, %s63
      %p72 = scmp.eq.s32.totalorder %s17, 1
      %p73 = por %p71, %p72
      %p74 = scmp.ne.s32.totalorder %s63, %s64
      %p75 = scmp.eq.s32.totalorder %s17, 0
      %p76 = por %p74, %p75
      %p77 = scmp.ne.s32.totalorder %s63, %s64
      %p78 = scmp.eq.s32.totalorder %s18, 1
      %p79 = por %p77, %p78
      %p81 = scmp.ne.s32.totalorder %s64, %s80
      %p82 = scmp.eq.s32.totalorder %s18, 0
      %p83 = por %p81, %p82
      %s84 = ssub.s32 %s20, %s27
      %p85 = scmp.eq.s32.totalorder %s84, 0
      %s87 = sadd.s32 %s86, 1
      %s88 = scalar_select %p85, %s86, %s87
      %p91 = pneg %p85
      %p92 = scmp.eq.s32.totalorder %s12, 1
      %p93 = por %p91, %p92
      %p94 = scmp.ne.s32.totalorder %s86, %s89
      %p95 = scmp.eq.s32.totalorder %s12, 0
      %p96 = por %p94, %p95
      %p97 = scmp.ne.s32.totalorder %s86, %s89
      %p98 = scmp.eq.s32.totalorder %s17, 1
      %p99 = por %p97, %p98
      %p100 = scmp.ne.s32.totalorder %s89, %s90
      %p101 = scmp.eq.s32.totalorder %s17, 0
      %p102 = por %p100, %p101
      %p103 = scmp.ne.s32.totalorder %s89, %s90
      %p104 = scmp.eq.s32.totalorder %s18, 1
      %p105 = por %p103, %p104
      %p107 = scmp.ne.s32.totalorder %s90, %s106
      %p108 = scmp.eq.s32.totalorder %s18, 0
      %p109 = por %p107, %p108
      %s110 = ssub.s32 %s19, %s31
      %s111 = ssub.s32 %s20, %s27
      %s112 = sor.u32 %s110, %s111
      %p113 = scmp.eq.s32.totalorder %s112, 0
      %s115 = sadd.s32 %s114, 1
      %s116 = scalar_select %p113, %s114, %s115
      %p119 = pneg %p113
      %p120 = scmp.eq.s32.totalorder %s12, 1
      %p121 = por %p119, %p120
      %p122 = scmp.ne.s32.totalorder %s114, %s117
      %p123 = scmp.eq.s32.totalorder %s12, 0
      %p124 = por %p122, %p123
      %p125 = scmp.ne.s32.totalorder %s114, %s117
      %p126 = scmp.eq.s32.totalorder %s17, 1
      %p127 = por %p125, %p126
      %p128 = scmp.ne.s32.totalorder %s117, %s118
      %p129 = scmp.eq.s32.totalorder %s17, 0
      %p130 = por %p128, %p129
      %p131 = scmp.ne.s32.totalorder %s117, %s118
      %p132 = scmp.eq.s32.totalorder %s18, 1
      %p133 = por %p131, %p132
      %p135 = scmp.ne.s32.totalorder %s118, %s134
      %p136 = scmp.eq.s32.totalorder %s18, 0
      %p137 = por %p135, %p136
      %p138 = scmp.le.s32.totalorder 1, %s12
      %p139 = scmp.lt.s32.totalorder %s12, 3
      %p140 = pnand %p138, %p139
      %p141 = pneg %p140
      // Predicated region
      $region9: #{tpu_custom_call.1} parent=5 // pred_check
        _
      $region10: #{tpu_custom_call.1} parent=5 // pred_check_branch
        %143 = sbr.rel (%p140) target = $region12
      $region11: #{tpu_custom_call.1} parent=5 // pred_region
        %s144 = ssub.s32 %s12, 1
        // Predicated region
        $region13: #{tpu_custom_call.1} parent=11 // pred_check
          %p145 = pneg %p76
        $region14: #{tpu_custom_call.1} parent=11 // pred_check_branch
          %147 = sbr.rel (%p145) target = $region16
        $region15: #{tpu_custom_call.1} parent=11 // pred_region
          %s148 = smul.u32 8, %s22
          %p149 = scmp.lt.s32.totalorder %s148, 7
          %s150 = scalar_select %p149, %s148, 7
          %s151 = smul.addr %s150, 8
          %s152 = scalar_lea.vmem %s1, %s151
          %s153 = smul.u32 8, %s22
        $region16: #{tpu_custom_call.1} parent=11 // pred_fallthru
          _
        // Predicated region
        $region17: #{tpu_custom_call.1} parent=11 // pred_check
          %p154 = pneg %p102
        $region18: #{tpu_custom_call.1} parent=11 // pred_check_branch
          %156 = sbr.rel (%p154) target = $region20
        $region19: #{tpu_custom_call.1} parent=11 // pred_region
          %p157 = scmp.lt.s32.totalorder %s22, 0
          %s158 = scalar_select %p157, %s22, 0
          %s159 = scalar_lea.vmem %s2, %s158
        $region20: #{tpu_custom_call.1} parent=11 // pred_fallthru
          _
      $region12: #{tpu_custom_call.1} parent=5 // pred_fallthru
        _
      %p160 = scmp.lt.s32.totalorder %s12, 2
      // Predicated region
      $region21: #{tpu_custom_call.1} parent=5 // pred_check
        %p161 = pneg %p160
      $region22: #{tpu_custom_call.1} parent=5 // pred_check_branch
        %163 = sbr.rel (%p161) target = $region24
      $region23: #{tpu_custom_call.1} parent=5 // pred_region
        // Predicated region
        $region25: #{tpu_custom_call.1} parent=23 // pred_check
          %p164 = pneg %p44
        $region26: #{tpu_custom_call.1} parent=23 // pred_check_branch
          %166 = sbr.rel (%p164) target = $region28
        $region27: #{tpu_custom_call.1} parent=23 // pred_region
          %p167 = scmp.lt.s32.totalorder %s19, 1
          %s168 = scalar_select %p167, %s19, 1
          %s169 = smul.addr %s168, 8
          %s170 = scalar_lea.vmem %s0, %s169
        $region28: #{tpu_custom_call.1} parent=23 // pred_fallthru
          _
      $region24: #{tpu_custom_call.1} parent=5 // pred_fallthru
        _
      %p171 = scmp.le.s32.totalorder 1, %s12
      %p172 = scmp.lt.s32.totalorder %s12, 3
      %p173 = pnand %p171, %p172
      %p174 = pneg %p173
      // Predicated region
      $region29: #{tpu_custom_call.1} parent=5 // pred_check
        _
      $region30: #{tpu_custom_call.1} parent=5 // pred_check_branch
        %176 = sbr.rel (%p173) target = $region32
      $region31: #{tpu_custom_call.1} parent=5 // pred_region
        %s177 = ssub.s32 %s12, 1
        %p178 = scmp.lt.s32.totalorder %s21, 1
        %s179 = scalar_select %p178, %s21, 1
        %s180 = smul.addr %s179, 8
        %s181 = scalar_lea.vmem %s0, %s180
        %p182 = pneg %p50
        %p183 = pneg %p47
        %s184 = smul.u32 8, %s22
        %p185 = scmp.lt.s32.totalorder %s184, 7
        %s186 = scalar_select %p185, %s184, 7
        %s187 = smul.addr %s186, 8
        %s188 = scalar_lea.vmem %s1, %s187
        %p189 = pneg %p76
        %p190 = pneg %p73
        %p191 = scmp.lt.s32.totalorder %s22, 0
        %s192 = scalar_select %p191, %s22, 0
        %s193 = scalar_lea.vmem %s2, %s192
        %p194 = pneg %p102
        %p195 = pneg %p99
        %p196 = pneg %p130
        %p197 = pneg %p127
        %s198 = sand.u32 %s117, 1
        %s199 = scalar_lea.sflag [#allocation3], %s198
        %s200 = sand.u32 %s117, 1
        %s201 = smul.addr %s200, 8
        %s202 = scalar_lea.vmem [#allocation2], %s201
        %p203 = scmp.lt.s32.totalorder %s21, 1
        %s204 = scalar_select %p203, %s21, 1
        %s205 = smul.addr %s204, 8
        %s206 = scalar_lea.vmem %s0, %s205
        %s207 = smul.u32 8, %s22
        %p208 = scmp.lt.s32.totalorder %s207, 7
        %s209 = scalar_select %p208, %s207, 7
        %s210 = smul.addr %s209, 8
        %s211 = scalar_lea.vmem %s1, %s210
        %s212 = smul.u32 8, %s22
        %p213 = scmp.lt.s32.totalorder %s22, 0
        %s214 = scalar_select %p213, %s22, 0
        %s215 = scalar_lea.vmem %s2, %s214
        %v216 = vld [vmem:[%s206] sm:$0xff]
        %v217 = vld [vmem:[%s211] sm:$0xff]
        %v218 = vld [vmem:[%s211 + $0x8] sm:$0xff]
        %v219 = vld [vmem:[%s211 + $0x10] sm:$0xff]
        %v220 = vld [vmem:[%s211 + $0x18] sm:$0xff]
        %v221 = vld [vmem:[%s211 + $0x20] sm:$0xff]
        %v222 = vld [vmem:[%s211 + $0x28] sm:$0xff]
        %v223 = vld [vmem:[%s211 + $0x30] sm:$0xff]
        %v224 = vld [vmem:[%s211 + $0x38] sm:$0xff]
        %v225 = vld [vmem:[%s215] sm:$0x1]
        %v227 = vlaneseq
        %v228 = vshrl.u32 %v227, 7
        %v229 = vsub.s32 0, %v228
        %v230 = vrot.slane %v225, %v229
        %vm232 = vcmask 261120
        %v234 = vsel %vm232, %v216, 0
        %v237 = vsel %vm232, %v217, 0
        %v240 = vsel %vm232, %v218, 0
        %v243 = vsel %vm232, %v219, 0
        %v246 = vsel %vm232, %v220, 0
        %v249 = vsel %vm232, %v221, 0
        %v252 = vsel %vm232, %v222, 0
        %v255 = vsel %vm232, %v223, 0
        %v258 = vsel %vm232, %v224, 0
        %260 = vmatprep.subr.mxu0 0.0
        %261 = vmatpush1.xpose.msra.mxu0 %v237
        %262 = vmatprep.subr.mxu0 0.0
        %263 = vmatpush1.xpose.msra.mxu0 %v240
        %264 = vmatprep.subr.mxu0 0.0
        %265 = vmatpush1.xpose.msra.mxu0 %v243
        %266 = vmatprep.subr.mxu0 0.0
        %267 = vmatpush1.xpose.msra.mxu0 %v246
        %268 = vmatprep.subr.mxu0 0.0
        %269 = vmatpush1.xpose.msra.mxu0 %v249
        %270 = vmatprep.subr.mxu0 0.0
        %271 = vmatpush1.xpose.msra.mxu0 %v252
        %272 = vmatprep.subr.mxu0 0.0
        %273 = vmatpush1.xpose.msra.mxu0 %v255
        %274 = vmatprep.subr.mxu0 0.0
        %275 = vmatpush1.xpose.msra.mxu0 %v258
        %276 = vmatprep.subr.mxu0 0.0
        %277 = vmatpush1.xpose.msra.mxu0 0.0
        %278 = vmatprep.subr.mxu0 0.0
        %279 = vmatpush1.xpose.msra.mxu0 0.0
        %280 = vmatprep.subr.mxu0 0.0
        %281 = vmatpush1.xpose.msra.mxu0 0.0
        %282 = vmatprep.subr.mxu0 0.0
        %283 = vmatpush1.xpose.msra.mxu0 0.0
        %284 = vmatprep.subr.mxu0 0.0
        %285 = vmatpush1.xpose.msra.mxu0 0.0
        %286 = vmatprep.subr.mxu0 0.0
        %287 = vmatpush1.xpose.msra.mxu0 0.0
        %288 = vmatprep.subr.mxu0 0.0
        %289 = vmatpush1.xpose.msra.mxu0 0.0
        %290 = vmatprep.subr.mxu0 0.0
        %291 = vmatpush1.xpose.msra.mxu0 0.0
        %292 = vmatprep.subr.mxu0 0.0
        %293 = vmatpush1.xpose.msra.mxu0 0.0
        %294 = vmatprep.subr.mxu0 0.0
        %295 = vmatpush1.xpose.msra.mxu0 0.0
        %296 = vmatprep.subr.mxu0 0.0
        %297 = vmatpush1.xpose.msra.mxu0 0.0
        %298 = vmatprep.subr.mxu0 0.0
        %299 = vmatpush1.xpose.msra.mxu0 0.0
        %300 = vmatprep.subr.mxu0 0.0
        %301 = vmatpush1.xpose.msra.mxu0 0.0
        %302 = vmatprep.subr.mxu0 0.0
        %303 = vmatpush1.xpose.msra.mxu0 0.0
        %304 = vmatprep.subr.mxu0 0.0
        %305 = vmatpush1.xpose.msra.mxu0 0.0
        %306 = vmatprep.subr.mxu0 0.0
        %307 = vmatpush1.xpose.msra.mxu0 0.0
        %308 = vmatprep.subr.mxu0 0.0
        %309 = vmatpush1.xpose.msra.mxu0 0.0
        %310 = vmatprep.subr.mxu0 0.0
        %311 = vmatpush1.xpose.msra.mxu0 0.0
        %312 = vmatprep.subr.mxu0 0.0
        %313 = vmatpush1.xpose.msra.mxu0 0.0
        %314 = vmatprep.subr.mxu0 0.0
        %315 = vmatpush1.xpose.msra.mxu0 0.0
        %316 = vmatprep.subr.mxu0 0.0
        %317 = vmatpush1.xpose.msra.mxu0 0.0
        %318 = vmatprep.subr.mxu0 0.0
        %319 = vmatpush1.xpose.msra.mxu0 0.0
        %320 = vmatprep.subr.mxu0 0.0
        %321 = vmatpush1.xpose.msra.mxu0 0.0
        %322 = vmatprep.subr.mxu0 0.0
        %323 = vmatpush1.xpose.msra.mxu0 0.0
        %324 = vmatprep.mubr.f32.mxu0 0.0
        %325 = vmatmul.mubr.f32.gmra.mrb[0].mxu0 %v234
        %v326 = vpop.f32.mrb[0].mxu0
        %v327 = vadd.f32 %v230, %v326
        %v328 = vpop.f32.mrb[0].mxu0
        %329 = vdwg.mxu0
        %v330 = vmul.f32 %v327, 0.5
        %vm331 = vcmask 523264
        %332 = vst.msk [vmem:[%s202] sm:$0xff] %vm331, %v330
        %s333 = sand.u32 %s117, 1
        %s334 = scalar_lea.sflag [#allocation3], %s333
        %s335 = sand.u32 %s117, 1
        %s336 = smul.addr %s335, 8
        %s337 = scalar_lea.vmem [#allocation2], %s336
        // Predicated region
        $region33: #{tpu_custom_call.1} parent=31 // pred_check
          %p338 = pneg %p127
        $region34: #{tpu_custom_call.1} parent=31 // pred_check_branch
          %340 = sbr.rel (%p338) target = $region36
        $region35: #{tpu_custom_call.1} parent=31 // pred_region
          %s342 = ssub.s32 128, 128
          %343 = vsyncadd %s334, %s342
          %s344 = sadd.s32 %s22, %s21
          %s345 = smul.addr %s344, 128
          %s346 = scalar_lea.hbm %s3, %s345
          %s348 = sshll.u32 %s337, 4
          %s349 = int_to_ptr.vmem [resolvable:$true] %s348
          %351 = dma.vmem_to_hbm [thread:$0]  %s349, 128, %s346, %s334
        $region36: #{tpu_custom_call.1} parent=31 // pred_fallthru
          _
      $region32: #{tpu_custom_call.1} parent=5 // pred_fallthru
        _
      %p352 = scmp.le.s32.totalorder 2, %s12
      // Predicated region
      $region37: #{tpu_custom_call.1} parent=5 // pred_check
        %p353 = pneg %p352
      $region38: #{tpu_custom_call.1} parent=5 // pred_check_branch
        %355 = sbr.rel (%p353) target = $region40
      $region39: #{tpu_custom_call.1} parent=5 // pred_region
        %s356 = ssub.s32 %s12, 2
        // Predicated region
        $region41: #{tpu_custom_call.1} parent=39 // pred_check
          %p357 = pneg %p133
        $region42: #{tpu_custom_call.1} parent=39 // pred_check_branch
          %359 = sbr.rel (%p357) target = $region44
        $region43: #{tpu_custom_call.1} parent=39 // pred_region
          %s360 = sand.u32 %s118, 1
          %s361 = scalar_lea.sflag [#allocation3], %s360
          %s362 = sand.u32 %s118, 1
          %s363 = smul.addr %s362, 8
          %s364 = scalar_lea.vmem [#allocation2], %s363
          %365 = dma.done %s361, 128
        $region44: #{tpu_custom_call.1} parent=39 // pred_fallthru
          _
      $region40: #{tpu_custom_call.1} parent=5 // pred_fallthru
        _
    $region6: #{tpu_custom_call.1} parent=1 // loop_footer
      %s16 = sadd.s32 1, %s12
    $region7: #{tpu_custom_call.1} parent=1 // loop_footer_branch
      %11 = sbr.rel target = $region3
    $region8: #{tpu_custom_call.1} parent=1 // loop_exit
      _
    %366 = vsyncpa [#allocation3], 1
    %s367 = scalar_lea.sflag [#allocation3], 1
    %368 = vsyncpa %s367, 1

</llo_original>
